<compile_context>
chip_gen: v7x
topology: tpu7x:2x2x1
jax: 0.10.0
libtpu: 0.0.40
codegen_flags: <defaults>
</compile_context>

<pallas_src>
import functools

import jax
import jax.numpy as jnp
from jax import lax
from jax.experimental import pallas as pl
from jax.experimental.pallas import tpu as pltpu

_LANE = 128      # vreg lane width
_SUBLANE = 8     # f32 sublane count


def _vmem_capacity_bytes():
    try:
        return int(pltpu.get_tpu_info().vmem_capacity_bytes)
    except Exception:
        return 64 * 1024 * 1024   # conservative fallback: v7x per-TC VMEM


_VMEM_CAP = _vmem_capacity_bytes()
# Tile-sizing budget and scoped-vmem ceiling, hard-capped so they are safe on
# every generation (64 MiB physical per TC on v7x, 128 MiB on v5e/v6e).
_VMEM_BUDGET = min(int(0.60 * _VMEM_CAP), 48 * 1024 * 1024)
_VMEM_LIMIT = min(int(0.75 * _VMEM_CAP), 64 * 1024 * 1024)


def _round_up(n, m):
    return ((n + m - 1) // m) * m


def prepare_params(weight, bias):
    """One-time parameter prep (do NOT redo this per forward call).

    weight: (Out, In) f32 (PyTorch nn.Linear layout); bias: (Out,) f32.
    Returns (w_p, b_p, out_features):
      w_p: (In, OutP) bf16 -- transposed, lane-padded, matmul-canonical.
      b_p: (1, OutP)  f32  -- padded lanes = finfo.min so softmax gives ~0.
    """
    out_features, in_features = weight.shape
    # 256-wide N pad when Out > 128 to fill the 256-wide v6e/v7x MXU; 128 for
    # small Out (optimal on v5e's 128x128 MXU and still fine on v6e/v7x).
    lane_pad = _LANE if out_features <= _LANE else 2 * _LANE
    out_p = max(lane_pad, _round_up(out_features, lane_pad))
    w_p = (jnp.zeros((in_features, out_p), jnp.bfloat16)
           .at[:, :out_features].set(weight.T.astype(jnp.bfloat16)))
    b_p = (jnp.full((1, out_p), jnp.finfo(jnp.float32).min, jnp.float32)
           .at[0, :out_features].set(bias.astype(jnp.float32)))
    return w_p, b_p, out_features


def _linear_softmax_kernel(x_ref, w_ref, b_ref, o_ref, *, chunk):
    # x_ref: (TB, In) f32 | w_ref: (In, OutP) bf16 | b_ref: (1, OutP) f32
    # o_ref: (TB, OutP) f32.  Padded output lanes carry bias=finfo.min -> ~0.
    w = w_ref[...]            # resident weight, loaded once per batch tile
    b = b_ref[...]
    tb = x_ref.shape[0]
    c = min(chunk, tb)        # static python ints at trace time
    n_full = tb // c
    rem = tb - n_full * c

    def process(r0, rows):
        x = x_ref[pl.ds(r0, rows), :].astype(jnp.bfloat16)       # bf16 MXU path
        logits = lax.dot_general(
            x, w,
            dimension_numbers=(((1,), (0,)), ((), ())),           # x @ w
            preferred_element_type=jnp.float32,                   # f32 accumulate
        ) + b
        m = jnp.max(logits, axis=-1, keepdims=True)               # XLU reduce
        e = jnp.exp(logits - m)                                    # EUP
        denom = jnp.sum(e, axis=-1, keepdims=True)                 # XLU reduce
        probs = e * pl.reciprocal(denom)                           # exact recip (EUP)
        o_ref[pl.ds(r0, rows), :] = probs.astype(o_ref.dtype)      # lane-dense vst

    if n_full > 0:
        def body(i, carry):
            process(pl.multiple_of(i * c, c), c)
            return carry
        lax.fori_loop(0, n_full, body, 0, unroll=True)
    if rem > 0:                                   # static tail (rem % 8 == 0)
        process(n_full * c, rem)


def _choose_tile_b(batch, in_features, out_p, cap):
    """Largest sublane-aligned batch tile fitting the VMEM budget."""
    resident = out_p * in_features * 2 + _SUBLANE * out_p * 4   # bf16 W + f32 bias
    per_row = 2 * 4 * (in_features + out_p)                     # 2x-buffered f32 x + out
    avail = max(_VMEM_BUDGET - resident, per_row * _SUBLANE)
    tb = max(_SUBLANE, min(cap, avail // per_row))
    tb = (tb // _SUBLANE) * _SUBLANE
    tb = min(tb, _round_up(batch, _SUBLANE))
    return max(_SUBLANE, int(tb))


@functools.partial(
    jax.jit, static_argnames=("out_features", "tile_b", "chunk", "core_parallel"))
def linear_estimator_forward(x, w_p, b_p, *, out_features, tile_b=2048,
                             chunk=256, core_parallel=False):
    """softmax(x @ W.T + b, axis=-1) using pre-prepared (w_p, b_p).

    x: (B, In) f32.  Note: for tiny per-call batches prefer the plain-XLA
    `linear_estimator_reference`; this kernel targets large-batch inference.
    Set core_parallel=True on v7x to shard batch tiles across both TCs.
    """
    batch, in_features = x.shape
    in_w, out_p = w_p.shape
    assert in_w == in_features and b_p.shape == (1, out_p)

    tb = _choose_tile_b(batch, in_features, out_p, tile_b)
    bp = _round_up(batch, tb)
    x_p = x if bp == batch else jnp.pad(x, ((0, bp - batch), (0, 0)))

    sem = pltpu.CORE_PARALLEL if core_parallel else pltpu.PARALLEL

    out = pl.pallas_call(
        functools.partial(_linear_softmax_kernel, chunk=chunk),
        out_shape=jax.ShapeDtypeStruct((bp, out_p), x.dtype),
        grid_spec=pl.GridSpec(
            grid=(bp // tb,),
            in_specs=[
                pl.BlockSpec((tb, in_features), lambda i: (i, 0)),     # batch-tiled x
                pl.BlockSpec((in_features, out_p), lambda i: (0, 0)),  # resident W
                pl.BlockSpec((1, out_p), lambda i: (0, 0)),            # resident b
            ],
            out_specs=pl.BlockSpec((tb, out_p), lambda i: (i, 0)),
        ),
        compiler_params=pltpu.CompilerParams(
            dimension_semantics=(sem,),
            vmem_limit_bytes=_VMEM_LIMIT,
        ),
    )(x_p, w_p, b_p)

    return out[:batch, :out_features]


def linear_estimator_reference(x, weight, bias):
    """Pure-XLA path (preferred dispatch for tiny per-call batches)."""
    return jax.nn.softmax(x @ weight.T + bias, axis=-1)


if __name__ == "__main__":
    # Shapes consistent with the module: input_space=(32,), output_space=16.
    batch, in_features, out_features = 8, 32, 16

    key = jax.random.PRNGKey(0)
    kx, kw, kb = jax.random.split(key, 3)

    # Deterministic init mimicking torch.nn.Linear: U(-1/sqrt(in), 1/sqrt(in)).
    bound = 1.0 / jnp.sqrt(jnp.float32(in_features))
    weight = jax.random.uniform(kw, (out_features, in_features),
                                minval=-bound, maxval=bound, dtype=jnp.float32)
    bias = jax.random.uniform(kb, (out_features,),
                              minval=-bound, maxval=bound, dtype=jnp.float32)
    x = jax.random.normal(kx, (batch, in_features), dtype=jnp.float32)

    # One-time parameter prep (transpose + pad + bf16), then the Pallas kernel.
    w_p, b_p, out_f = prepare_params(weight, bias)
    y = linear_estimator_forward(x, w_p, b_p, out_features=out_f)
    y = jax.block_until_ready(y)

    # Sanity check vs. pure-JAX f32 reference (tolerance covers bf16 MXU inputs).
    ref = linear_estimator_reference(x, weight, bias)
    assert y.shape == (batch, out_features)
    assert jnp.allclose(y, ref, atol=5e-3, rtol=5e-3), "mismatch vs reference"
    assert jnp.allclose(jnp.sum(y, axis=-1), 1.0, atol=1e-3), "rows must sum to ~1"

    print("KERNEL_OK")
</pallas_src>

<mosaic_0001>
module attributes {stable_mosaic.version = 11 : i64} {
  func.func @_linear_softmax_kernel(%arg0: i32, %arg1: memref<8x32xf32, #tpu.memory_space<vmem>>, %arg2: memref<32x128xbf16, #tpu.memory_space<vmem>>, %arg3: memref<1x128xf32, #tpu.memory_space<vmem>>, %arg4: memref<8x128xf32, #tpu.memory_space<vmem>>) attributes {dimension_semantics = [#tpu.dimension_semantics<parallel>], iteration_bounds = array<i64: 1>, scalar_prefetch = 0 : i64, scratch_operands = 0 : i64, tpu.core_type = #tpu.core_type<tc>, window_params = [{transform_indices = @transform_0, window_bounds = array<i64: 8, 32>}, {pipeline_mode = #tpu.pipeline_mode<synchronous>, transform_indices = @transform_1, window_bounds = array<i64: 32, 128>}, {pipeline_mode = #tpu.pipeline_mode<synchronous>, transform_indices = @transform_2, window_bounds = array<i64: 1, 128>}, {transform_indices = @transform_3, window_bounds = array<i64: 8, 128>}]} {
    %c0 = arith.constant 0 : index
    %c0_0 = arith.constant 0 : index
    %0 = vector.load %arg2[%c0, %c0_0] : memref<32x128xbf16, #tpu.memory_space<vmem>>, vector<32x128xbf16>
    %c0_1 = arith.constant 0 : index
    %c0_2 = arith.constant 0 : index
    %1 = vector.load %arg3[%c0_1, %c0_2] : memref<1x128xf32, #tpu.memory_space<vmem>>, vector<1x128xf32>
    %c0_i32 = arith.constant 0 : i32
    %c8_i32 = arith.constant 8 : i32
    %2 = arith.muli %c0_i32, %c8_i32 : i32
    %3 = tpu.assume_multiple %2, 8 : i32
    %4 = arith.index_cast %3 : i32 to index
    %c0_3 = arith.constant 0 : index
    %5 = vector.load %arg1[%4, %c0_3] : memref<8x32xf32, #tpu.memory_space<vmem>>, vector<8x32xf32>
    %6 = arith.truncf %5 : vector<8x32xf32> to vector<8x32xbf16>
    %cst = arith.constant dense<0.000000e+00> : vector<8x128xf32>
    %7 = tpu.matmul %6, %0, %cst {dimension_numbers = #tpu.dot_dimension_numbers<[1], [0], [0], [1], [0, 0, 1, 1], [], []>} : vector<8x32xbf16>, vector<32x128xbf16>, vector<8x128xf32> -> vector<8x128xf32>
    %8 = vector.broadcast %1 : vector<1x128xf32> to vector<8x128xf32>
    %9 = arith.addf %7, %8 : vector<8x128xf32>
    %cst_4 = arith.constant dense<0xFF800000> : vector<8xf32>
    %10 = vector.multi_reduction <maximumf>, %9, %cst_4 [1] : vector<8x128xf32> to vector<8xf32>
    %11 = vector.shape_cast %10 : vector<8xf32> to vector<8x1xf32>
    %12 = vector.broadcast %11 : vector<8x1xf32> to vector<8x128xf32>
    %13 = arith.subf %9, %12 : vector<8x128xf32>
    %14 = math.exp %13 : vector<8x128xf32>
    %cst_5 = arith.constant dense<0.000000e+00> : vector<8xf32>
    %15 = vector.multi_reduction <add>, %14, %cst_5 [1] : vector<8x128xf32> to vector<8xf32>
    %16 = vector.shape_cast %15 : vector<8xf32> to vector<8x1xf32>
    %17 = tpu.reciprocal %16 : vector<8x1xf32> -> vector<8x1xf32>
    %18 = vector.broadcast %17 : vector<8x1xf32> to vector<8x128xf32>
    %19 = arith.mulf %14, %18 : vector<8x128xf32>
    %20 = arith.index_cast %3 : i32 to index
    %c0_6 = arith.constant 0 : index
    %21 = vector.load %arg4[%20, %c0_6] : memref<8x128xf32, #tpu.memory_space<vmem>>, vector<8x128xf32>
    tpu.vector_store %arg4[%20, %c0_6], %19 {strides = array<i32>} : memref<8x128xf32, #tpu.memory_space<vmem>>, vector<8x128xf32>,
    %c1_i32 = arith.constant 1 : i32
    return
  }
  func.func @transform_0(%arg0: i32) -> (i32, i32) {
    %c0_i32 = arith.constant 0 : i32
    %c0_i32_0 = arith.constant 0 : i32
    return %arg0, %c0_i32 : i32, i32
  }
  func.func @transform_1(%arg0: i32) -> (i32, i32) {
    %c0_i32 = arith.constant 0 : i32
    %c0_i32_0 = arith.constant 0 : i32
    %c0_i32_1 = arith.constant 0 : i32
    return %c0_i32, %c0_i32_0 : i32, i32
  }
  func.func @transform_2(%arg0: i32) -> (i32, i32) {
    %c0_i32 = arith.constant 0 : i32
    %c0_i32_0 = arith.constant 0 : i32
    %c0_i32_1 = arith.constant 0 : i32
    return %c0_i32, %c0_i32_0 : i32, i32
  }
  func.func @transform_3(%arg0: i32) -> (i32, i32) {
    %c0_i32 = arith.constant 0 : i32
    %c0_i32_0 = arith.constant 0 : i32
    return %arg0, %c0_i32 : i32, i32
  }
}

</mosaic_0001>

<llo_original>
// kernel: linear_estimator_forward.1
$region0: #{linear_estimator_forward.1}
  #allocation0 [shape = 'u32[]', space=smem, size = 0x4, offset = 0x4, fixed_abs, tag = 'smem constant byte address 0x4 - core index']
  #allocation1 [shape = 'u32[144,128]{1,0:T(1,128)}', space=vmem, size = 0x12000, scoped, tag = 'internal scratch']
  %s0 = inlined_call_operand.hbm [shape: f32[8,32], index: 0, kind: input, shape index: {}]
  %s1 = inlined_call_operand.hbm [shape: bf16[32,128], index: 1, kind: input, shape index: {}]
  %s2 = inlined_call_operand.vmem [shape: f32[1,128], index: 2, kind: input, shape index: {}]
  %s3 = inlined_call_operand.hbm [shape: f32[8,128], index: 3, kind: output, shape index: {}]
  %s4 = sld [smem:[#allocation0]]
  $region30: #{linear_estimator_forward.1} parent=0
    _
  %s6 = ssub.s32 1, %s4
  %s7 = scalar_select 0, %s6, %s4
  $region1: #{linear_estimator_forward.1} parent=0
    #allocation2 [shape = 'u8[4096]{0}', space=vmem, size = 0x1000, scoped, tag = 'input window, operand 0, single buffered']
    #allocation3 [shape = 's32[1]{0}', space=sflag, size = 0x4, scoped, tag = 'scoped memory for linear_estimator_forward.1']
    #allocation4 [shape = 's32[1]{0}', space=sflag, size = 0x4, scoped, tag = 'scoped memory for linear_estimator_forward.1']
    #allocation5 [shape = 'u8[8192]{0}', space=vmem, size = 0x2000, scoped, tag = 'input window, operand 1, single buffered']
    #allocation6 [shape = 's32[1]{0}', space=sflag, size = 0x4, scoped, tag = 'scoped memory for linear_estimator_forward.1']
    #allocation7 [shape = 'u8[4096]{0}', space=vmem, size = 0x1000, scoped, tag = 'output window, operand 0, single buffered']
    %8 = vsyncpa [#allocation3], 0
    %9 = vsyncpa [#allocation6], 0
    %10 = vsyncpa [#allocation4], 0
    // Predicated region
    $region2: #{linear_estimator_forward.1} parent=1 // pred_check
      _
    $region3: #{linear_estimator_forward.1} parent=1 // pred_check_branch
      %12 = sbr.rel (0) target = $region5
    $region4: #{linear_estimator_forward.1} parent=1 // pred_region
      %s14 = ssub.s32 128, 128
      %15 = vsyncadd [#allocation3], %s14
      %s17 = sshll.u32 [#allocation2], 4
      %s18 = int_to_ptr.vmem [resolvable:$true] %s17
      %20 = dma.hbm_to_vmem [thread:$0]  %s0, 128, %s18, [#allocation3]
    $region5: #{linear_estimator_forward.1} parent=1 // pred_fallthru
      _
    // Predicated region
    $region6: #{linear_estimator_forward.1} parent=1 // pred_check
      _
    $region7: #{linear_estimator_forward.1} parent=1 // pred_check_branch
      %22 = sbr.rel (0) target = $region9
    $region8: #{linear_estimator_forward.1} parent=1 // pred_region
      %s24 = ssub.s32 256, 256
      %25 = vsyncadd [#allocation6], %s24
      %s26 = sshll.u32 [#allocation5], 4
      %s27 = int_to_ptr.vmem [resolvable:$true] %s26
      %32 = dma.hbm_to_vmem [thread:$0]  %s1, 256, %s27, [#allocation6], 64, 64, 4
    $region9: #{linear_estimator_forward.1} parent=1 // pred_fallthru
      _
    // Predicated region
    $region10: #{linear_estimator_forward.1} parent=1 // pred_check
      _
    $region11: #{linear_estimator_forward.1} parent=1 // pred_check_branch
      %34 = sbr.rel (0) target = $region13
    $region12: #{linear_estimator_forward.1} parent=1 // pred_region
      _
    $region13: #{linear_estimator_forward.1} parent=1 // pred_fallthru
      _
    // Predicated region
    $region14: #{linear_estimator_forward.1} parent=1 // pred_check
      _
    $region15: #{linear_estimator_forward.1} parent=1 // pred_check_branch
      %36 = sbr.rel (0) target = $region17
    $region16: #{linear_estimator_forward.1} parent=1 // pred_region
      %37 = dma.done [#allocation3], 128
    $region17: #{linear_estimator_forward.1} parent=1 // pred_fallthru
      _
    // Predicated region
    $region18: #{linear_estimator_forward.1} parent=1 // pred_check
      _
    $region19: #{linear_estimator_forward.1} parent=1 // pred_check_branch
      %39 = sbr.rel (0) target = $region21
    $region20: #{linear_estimator_forward.1} parent=1 // pred_region
      %40 = dma.done [#allocation6], 256
    $region21: #{linear_estimator_forward.1} parent=1 // pred_fallthru
      _
    %v42 = vld [vmem:[#allocation5] sm:$0xf]
    %v43 = vld [vmem:[#allocation5 + $0x4] sm:$0xf]
    %v44 = vld [vmem:[#allocation5 + $0x8] sm:$0xf]
    %v45 = vld [vmem:[#allocation5 + $0xc] sm:$0xf]
    %v46 = vld [vmem:[%s2] sm:$0x1]
    %v47 = vld [vmem:[#allocation2] sm:$0xff]
    %v48 = vpack.c.bf16 %v47, %v47
    %v50 = vlaneseq
    %v51 = vshrl.u32 %v50, 7
    %v52 = vsub.s32 0, %v51
    %v53 = vrot.slane %v46, %v52
    %v59 = vunpack.c.l.b16 %v42
    %v60 = vunpack.c.l.b16 %v43
    %v61 = vunpack.c.l.b16 %v44
    %v62 = vunpack.c.l.b16 %v45
    %v63 = vpack.c.b16 %v60, %v59
    %v64 = vpack.c.b16 %v62, %v61
    %vm67 = vcmask 261120
    %v69 = vsel %vm67, %v48, 0
    %71 = vmatprep.subr.bf16.mxu0 0
    %72 = vmatpush1.bf16.msra.mxu0 %v63
    %73 = vmatprep.subr.bf16.mxu0 0
    %74 = vmatpush1.bf16.msra.mxu0 %v64
    %75 = vmatprep.subr.bf16.mxu0 0
    %76 = vmatpush1.bf16.msra.mxu0 0
    %77 = vmatprep.subr.bf16.mxu0 0
    %78 = vmatpush1.bf16.msra.mxu0 0
    %79 = vmatprep.subr.bf16.mxu0 0
    %80 = vmatpush1.bf16.msra.mxu0 0
    %81 = vmatprep.subr.bf16.mxu0 0
    %82 = vmatpush1.bf16.msra.mxu0 0
    %83 = vmatprep.subr.bf16.mxu0 0
    %84 = vmatpush1.bf16.msra.mxu0 0
    %85 = vmatprep.subr.bf16.mxu0 0
    %86 = vmatpush1.bf16.msra.mxu0 0
    %87 = vmatprep.subr.bf16.mxu0 0
    %88 = vmatpush1.bf16.msra.mxu0 0
    %89 = vmatprep.subr.bf16.mxu0 0
    %90 = vmatpush1.bf16.msra.mxu0 0
    %91 = vmatprep.subr.bf16.mxu0 0
    %92 = vmatpush1.bf16.msra.mxu0 0
    %93 = vmatprep.subr.bf16.mxu0 0
    %94 = vmatpush1.bf16.msra.mxu0 0
    %95 = vmatprep.subr.bf16.mxu0 0
    %96 = vmatpush1.bf16.msra.mxu0 0
    %97 = vmatprep.subr.bf16.mxu0 0
    %98 = vmatpush1.bf16.msra.mxu0 0
    %99 = vmatprep.subr.bf16.mxu0 0
    %100 = vmatpush1.bf16.msra.mxu0 0
    %101 = vmatprep.subr.bf16.mxu0 0
    %102 = vmatpush1.bf16.msra.mxu0 0
    %103 = vmatprep.mubr.bf16.mxu0 0
    %104 = vmatmul.mubr.bf16.gmra.mrb[0].mxu0 %v69
    %v105 = vpop.f32.mrb[0].mxu0
    %v106 = vadd.f32 %v53, %v105
    %v107 = vpop.f32.mrb[0].mxu0
    %v108 = vpop.f32.mrb[0].mxu0
    %v109 = vpop.f32.mrb[0].mxu0
    %110 = vdwg.mxu0
    %111 = vmax.xlane.f32.xlu0 %v106
    %v112 = vpop.xlane.xlu0 %111
    %v113 = vsub.f32 %v106, %v112
    %v114 = vmul.f32 %v113, 1.442695
    %v115 = vpow.pop %v114
    %116 = vadd.xlane.f32.xlu0 %v115
    %v117 = vpop.xlane.xlu0 %116
    %v118 = vrcp.pop %v117
    %v119 = vmul.f32 %v115, %v118
    %120 = vst [vmem:[#allocation7] sm:$0xff] %v119
    // Predicated region
    $region22: #{linear_estimator_forward.1} parent=1 // pred_check
      _
    $region23: #{linear_estimator_forward.1} parent=1 // pred_check_branch
      %122 = sbr.rel (0) target = $region25
    $region24: #{linear_estimator_forward.1} parent=1 // pred_region
      %s124 = ssub.s32 128, 128
      %125 = vsyncadd [#allocation4], %s124
      %s127 = sshll.u32 [#allocation7], 4
      %s128 = int_to_ptr.vmem [resolvable:$true] %s127
      %130 = dma.vmem_to_hbm [thread:$0]  %s128, 128, %s3, [#allocation4]
    $region25: #{linear_estimator_forward.1} parent=1 // pred_fallthru
      _
    // Predicated region
    $region26: #{linear_estimator_forward.1} parent=1 // pred_check
      _
    $region27: #{linear_estimator_forward.1} parent=1 // pred_check_branch
      %132 = sbr.rel (0) target = $region29
    $region28: #{linear_estimator_forward.1} parent=1 // pred_region
      %133 = dma.done [#allocation4], 128
    $region29: #{linear_estimator_forward.1} parent=1 // pred_fallthru
      _
    %134 = vsyncpa [#allocation3], 1
    %135 = vsyncpa [#allocation6], 1
    %136 = vsyncpa [#allocation4], 1

</llo_original>
